<compile_context>
chip_gen: v5e
topology: v5e:2x2
jax: 0.10.0
libtpu: 0.0.40
codegen_flags: <defaults>
</compile_context>

<pallas_src>
import functools

import jax
import jax.numpy as jnp
from jax import lax
from jax.experimental import pallas as pl
from jax.experimental.pallas import tpu as pltpu


_LANE = 128          # lane width / feature-dim padding
_TILE = 512          # node tile (rows & reduction) — comfortably fits VMEM
_L2_EPS = 1e-12      # F.normalize default eps


def _round_up(x, m):
    return ((x + m - 1) // m) * m


def _pad2d(x, rows, cols):
    pr, pc = rows - x.shape[0], cols - x.shape[1]
    if pr or pc:
        x = jnp.pad(x, ((0, pr), (0, pc)))
    return x


# ----------------------------------------------------------------------------
# Fused per-layer kernel
# ----------------------------------------------------------------------------
def _gcn_layer_kernel(a_ref, x_ref, w_ref, o_ref, acc_ref, *, apply_l2):
    """One GCN layer: Y = ReLU((A @ X) @ W)  [+ L2 normalize on last layer].

    Grid = (row tiles, k reduction tiles).  acc_ref accumulates A@X in f32;
    the small @W matmul, ReLU and optional L2 are fused into the k-finalize
    epilogue so each row tile hits HBM exactly once per layer.
    """
    k = pl.program_id(1)

    @pl.when(k == 0)
    def _():
        acc_ref[...] = jnp.zeros_like(acc_ref)

    acc_ref[...] += jnp.dot(a_ref[...], x_ref[...],
                            preferred_element_type=jnp.float32)

    @pl.when(k == pl.num_programs(1) - 1)
    def _():
        ax = acc_ref[...].astype(jnp.bfloat16)                  # MXU input
        y = jnp.dot(ax, w_ref[...], preferred_element_type=jnp.float32)
        y = jnp.maximum(y, 0.0)                                  # ReLU
        if apply_l2:
            # F.normalize(x, p=2, dim=-1): x / max(||x||, eps)
            #   == x * rsqrt(max(sum(x^2), eps^2))   (rsqrt -> EUP slot)
            ss = jnp.sum(y * y, axis=-1, keepdims=True)
            y = y * lax.rsqrt(jnp.maximum(ss, _L2_EPS * _L2_EPS))
        o_ref[...] = y.astype(o_ref.dtype)


def _gcn_layer(a_pad, x_pad, w_pad, tm, tk, apply_l2, out_dtype):
    n_pad = a_pad.shape[0]
    d_in_pad = x_pad.shape[1]
    d_out_pad = w_pad.shape[1]
    kernel = functools.partial(_gcn_layer_kernel, apply_l2=apply_l2)
    out_isz = jnp.dtype(out_dtype).itemsize
    return pl.pallas_call(
        kernel,
        out_shape=jax.ShapeDtypeStruct((n_pad, d_out_pad), out_dtype),
        grid=(n_pad // tm, n_pad // tk),              # reduction axis last
        in_specs=[
            pl.BlockSpec((tm, tk), lambda i, k: (i, k)),            # A tile
            pl.BlockSpec((tk, d_in_pad), lambda i, k: (k, 0)),      # X tile
            pl.BlockSpec((d_in_pad, d_out_pad), lambda i, k: (0, 0)),  # W
        ],
        out_specs=pl.BlockSpec((tm, d_out_pad), lambda i, k: (i, 0)),
        scratch_shapes=[pltpu.VMEM((tm, d_in_pad), jnp.float32)],
        compiler_params=pltpu.CompilerParams(
            dimension_semantics=("parallel", "arbitrary")),
        cost_estimate=pl.CostEstimate(
            flops=2 * n_pad * n_pad * d_in_pad
                  + 2 * n_pad * d_in_pad * d_out_pad,
            transcendentals=0,
            bytes_accessed=n_pad * n_pad * 2
                           + (n_pad // tm) * n_pad * d_in_pad * 2
                           + d_in_pad * d_out_pad * 2
                           + n_pad * d_out_pad * out_isz),
    )(a_pad, x_pad, w_pad)


# ----------------------------------------------------------------------------
# GNNStackStage (stage_type='stack', l2norm=True)
# ----------------------------------------------------------------------------
def gnn_stack_stage(x, a_hat, weights):
    """Apply num_layers GCN layers sequentially, then L2-normalize (dim=-1)."""
    n, dim_in = x.shape
    dim_out = weights[-1].shape[1]
    num_layers = len(weights)

    # Padding: feature dims to 128 lanes, node dim to the tile size.
    n_pad = _round_up(n, _LANE)
    tile = min(_TILE, n_pad)
    n_pad = _round_up(n_pad, tile)
    d_in_pad = _round_up(dim_in, _LANE)
    d_out_pad = _round_up(dim_out, _LANE)

    # MXU inputs in bf16 (memory-bound matmul), f32 accumulation in-kernel.
    a_pad = _pad2d(a_hat.astype(jnp.float32), n_pad, n_pad).astype(jnp.bfloat16)
    x_pad = _pad2d(x.astype(jnp.float32), n_pad, d_in_pad).astype(jnp.bfloat16)

    for i, w in enumerate(weights):
        din_p = d_in_pad if i == 0 else d_out_pad
        w_pad = _pad2d(w.astype(jnp.float32), din_p,
                       d_out_pad).astype(jnp.bfloat16)
        last = (i == num_layers - 1)
        x_pad = _gcn_layer(a_pad, x_pad, w_pad, tile, tile,
                           apply_l2=last,
                           out_dtype=jnp.float32 if last else jnp.bfloat16)

    return x_pad[:n, :dim_out]


# ----------------------------------------------------------------------------
# Host-side helpers (graph construction / init)
# ----------------------------------------------------------------------------
def build_norm_adj(edge_index, num_nodes):
    """GCN normalization: A_hat = D^{-1/2} (A + I) D^{-1/2}, dense f32."""
    src, dst = edge_index
    a = jnp.zeros((num_nodes, num_nodes), jnp.float32)
    a = a.at[src, dst].set(1.0)
    a = a.at[dst, src].set(1.0)                       # symmetric
    a = a + jnp.eye(num_nodes, dtype=jnp.float32)     # self loops
    a = jnp.minimum(a, 1.0)
    deg = jnp.sum(a, axis=1)
    d_inv_sqrt = 1.0 / jnp.sqrt(jnp.maximum(deg, 1e-12))
    return a * d_inv_sqrt[:, None] * d_inv_sqrt[None, :]


def init_weights(key, dim_in, dim_out, num_layers):
    """Deterministic Glorot-ish init matching stack-stage layer dims."""
    weights = []
    for i in range(num_layers):
        d_in = dim_in if i == 0 else dim_out
        key, sub = jax.random.split(key)
        scale = jnp.sqrt(2.0 / (d_in + dim_out)).astype(jnp.float32)
        weights.append(scale * jax.random.normal(sub, (d_in, dim_out),
                                                 dtype=jnp.float32))
    return weights


def _reference(x, a_hat, weights):
    """Pure-JAX f32 reference of the stack stage (for tolerance check)."""
    for w in weights:
        x = jnp.maximum(a_hat @ (x @ w), 0.0)
    nrm = jnp.sqrt(jnp.sum(x * x, axis=-1, keepdims=True))
    return x / jnp.maximum(nrm, _L2_EPS)


if __name__ == "__main__":
    key = jax.random.PRNGKey(0)

    num_nodes = 64
    dim_in = 16
    dim_out = 32
    num_layers = 3
    num_edges = 128

    k_x, k_e, k_w = jax.random.split(key, 3)
    x = jax.random.normal(k_x, (num_nodes, dim_in), dtype=jnp.float32)
    edge_index = jax.random.randint(k_e, (2, num_edges), 0, num_nodes,
                                    dtype=jnp.int32)
    a_hat = build_norm_adj(edge_index, num_nodes)
    weights = init_weights(k_w, dim_in, dim_out, num_layers)

    out = gnn_stack_stage(x, a_hat, weights)
    out = jax.block_until_ready(out)

    assert out.shape == (num_nodes, dim_out)
    assert bool(jnp.all(jnp.isfinite(out)))

    ref = _reference(x, a_hat, weights)
    # bf16 A/X/W on the MXU path -> loose tolerance vs f32 reference.
    assert bool(jnp.allclose(out, ref, atol=1e-1, rtol=1e-1)), (
        "max abs err = %g" % float(jnp.max(jnp.abs(out - ref))))

    print("KERNEL_OK")
</pallas_src>

<mosaic_0001>
module attributes {stable_mosaic.version = 11 : i64} {
  func.func @_gcn_layer_kernel(%arg0: i32, %arg1: i32, %arg2: memref<128x128xbf16, #tpu.memory_space<vmem>>, %arg3: memref<128x128xbf16, #tpu.memory_space<vmem>>, %arg4: memref<128x128xbf16, #tpu.memory_space<vmem>>, %arg5: memref<128x128xbf16, #tpu.memory_space<vmem>>, %arg6: memref<128x128xf32, #tpu.memory_space<vmem>>) attributes {dimension_semantics = [#tpu.dimension_semantics<parallel>, #tpu.dimension_semantics<arbitrary>], iteration_bounds = array<i64: 1, 1>, scalar_prefetch = 0 : i64, scratch_operands = 1 : i64, tpu.core_type = #tpu.core_type<tc>, window_params = [{transform_indices = @transform_0, window_bounds = array<i64: 128, 128>}, {transform_indices = @transform_1, window_bounds = array<i64: 128, 128>}, {pipeline_mode = #tpu.pipeline_mode<synchronous>, transform_indices = @transform_2, window_bounds = array<i64: 128, 128>}, {transform_indices = @transform_3, window_bounds = array<i64: 128, 128>}]} {
    %c0_i32 = arith.constant 0 : i32
    %0 = arith.cmpi eq, %arg1, %c0_i32 : i32
    %1 = arith.extui %0 : i1 to i32
    %c0_i32_0 = arith.constant 0 : i32
    %2 = arith.cmpi ne, %1, %c0_i32_0 : i32
    scf.if %2 {
      %cst_10 = arith.constant 0.000000e+00 : f32
      %12 = vector.broadcast %cst_10 : f32 to vector<128x128xf32>
      %c0_11 = arith.constant 0 : index
      %c0_12 = arith.constant 0 : index
      %13 = vector.load %arg6[%c0_11, %c0_12] : memref<128x128xf32, #tpu.memory_space<vmem>>, vector<128x128xf32>
      tpu.vector_store %arg6[%c0_11, %c0_12], %12 {strides = array<i32>} : memref<128x128xf32, #tpu.memory_space<vmem>>, vector<128x128xf32>,
    } else {
    }
    %c0 = arith.constant 0 : index
    %c0_1 = arith.constant 0 : index
    %3 = vector.load %arg6[%c0, %c0_1] : memref<128x128xf32, #tpu.memory_space<vmem>>, vector<128x128xf32>
    %c0_2 = arith.constant 0 : index
    %c0_3 = arith.constant 0 : index
    %4 = vector.load %arg2[%c0_2, %c0_3] : memref<128x128xbf16, #tpu.memory_space<vmem>>, vector<128x128xbf16>
    %c0_4 = arith.constant 0 : index
    %c0_5 = arith.constant 0 : index
    %5 = vector.load %arg3[%c0_4, %c0_5] : memref<128x128xbf16, #tpu.memory_space<vmem>>, vector<128x128xbf16>
    %cst = arith.constant dense<0.000000e+00> : vector<128x128xf32>
    %6 = tpu.matmul %4, %5, %cst {dimension_numbers = #tpu.dot_dimension_numbers<[1], [0], [0], [1], [0, 0, 1, 1], [], []>} : vector<128x128xbf16>, vector<128x128xbf16>, vector<128x128xf32> -> vector<128x128xf32>
    %7 = arith.addf %3, %6 : vector<128x128xf32>
    %c0_6 = arith.constant 0 : index
    %c0_7 = arith.constant 0 : index
    %8 = vector.load %arg6[%c0_6, %c0_7] : memref<128x128xf32, #tpu.memory_space<vmem>>, vector<128x128xf32>
    tpu.vector_store %arg6[%c0_6, %c0_7], %7 {strides = array<i32>} : memref<128x128xf32, #tpu.memory_space<vmem>>, vector<128x128xf32>,
    %c0_i32_8 = arith.constant 0 : i32
    %9 = arith.cmpi eq, %arg1, %c0_i32_8 : i32
    %10 = arith.extui %9 : i1 to i32
    %c0_i32_9 = arith.constant 0 : i32
    %11 = arith.cmpi ne, %10, %c0_i32_9 : i32
    scf.if %11 {
      %c0_10 = arith.constant 0 : index
      %c0_11 = arith.constant 0 : index
      %12 = vector.load %arg6[%c0_10, %c0_11] : memref<128x128xf32, #tpu.memory_space<vmem>>, vector<128x128xf32>
      %13 = arith.truncf %12 : vector<128x128xf32> to vector<128x128xbf16>
      %c0_12 = arith.constant 0 : index
      %c0_13 = arith.constant 0 : index
      %14 = vector.load %arg4[%c0_12, %c0_13] : memref<128x128xbf16, #tpu.memory_space<vmem>>, vector<128x128xbf16>
      %cst_14 = arith.constant dense<0.000000e+00> : vector<128x128xf32>
      %15 = tpu.matmul %13, %14, %cst_14 {dimension_numbers = #tpu.dot_dimension_numbers<[1], [0], [0], [1], [0, 0, 1, 1], [], []>} : vector<128x128xbf16>, vector<128x128xbf16>, vector<128x128xf32> -> vector<128x128xf32>
      %cst_15 = arith.constant 0.000000e+00 : f32
      %16 = vector.broadcast %cst_15 : f32 to vector<128x128xf32>
      %17 = arith.maximumf %15, %16 : vector<128x128xf32>
      %18 = arith.truncf %17 : vector<128x128xf32> to vector<128x128xbf16>
      %c0_16 = arith.constant 0 : index
      %c0_17 = arith.constant 0 : index
      %19 = vector.load %arg5[%c0_16, %c0_17] : memref<128x128xbf16, #tpu.memory_space<vmem>>, vector<128x128xbf16>
      tpu.vector_store %arg5[%c0_16, %c0_17], %18 {strides = array<i32>} : memref<128x128xbf16, #tpu.memory_space<vmem>>, vector<128x128xbf16>,
    } else {
    }
    return
  }
  func.func @transform_0(%arg0: i32, %arg1: i32) -> (i32, i32) {
    %c0_i32 = arith.constant 0 : i32
    return %arg0, %arg1 : i32, i32
  }
  func.func @transform_1(%arg0: i32, %arg1: i32) -> (i32, i32) {
    %c0_i32 = arith.constant 0 : i32
    %c0_i32_0 = arith.constant 0 : i32
    return %arg1, %c0_i32 : i32, i32
  }
  func.func @transform_2(%arg0: i32, %arg1: i32) -> (i32, i32) {
    %c0_i32 = arith.constant 0 : i32
    %c0_i32_0 = arith.constant 0 : i32
    %c0_i32_1 = arith.constant 0 : i32
    return %c0_i32, %c0_i32_0 : i32, i32
  }
  func.func @transform_3(%arg0: i32, %arg1: i32) -> (i32, i32) {
    %c0_i32 = arith.constant 0 : i32
    %c0_i32_0 = arith.constant 0 : i32
    return %arg0, %c0_i32 : i32, i32
  }
}

</mosaic_0001>

<llo_original>
// kernel: tpu_custom_call.1
$region0: #{tpu_custom_call.1}
  #allocation0 [shape = 'u32[]', space=smem, size = 0x4, offset = 0x4, fixed_abs, tag = 'smem constant byte address 0x4 - core index']
  #allocation1 [shape = 'u32[72,128]{1,0:T(1,128)}', space=vmem, size = 0x9000, scoped, tag = 'internal scratch']
  #allocation2 [shape = 'f32[128,128]{1,0:T(8,128)}', space=vmem, size = 0x10000, scoped, tag = 'scratch operand']
  %s0 = inlined_call_operand.hbm [shape: bf16[128,128], index: 0, kind: input, shape index: {}]
  %s1 = inlined_call_operand.hbm [shape: bf16[128,128], index: 1, kind: input, shape index: {}]
  %s2 = inlined_call_operand.hbm [shape: bf16[128,128], index: 2, kind: input, shape index: {}]
  %s3 = inlined_call_operand.hbm [shape: bf16[128,128], index: 3, kind: output, shape index: {}]
  %s4 = sld [smem:[#allocation0]]
  $region42: #{tpu_custom_call.1} parent=0
    _
  %s6 = ssub.s32 1, %s4
  %s7 = scalar_select 0, %s6, %s4
  $region1: #{tpu_custom_call.1} parent=0
    #allocation3 [shape = 'u8[32768]{0}', space=vmem, size = 0x8000, scoped, tag = 'input window, operand 0, single buffered']
    #allocation4 [shape = 's32[1]{0}', space=sflag, size = 0x4, scoped, tag = 'scoped memory for tpu_custom_call.1']
    #allocation5 [shape = 's32[1]{0}', space=sflag, size = 0x4, scoped, tag = 'scoped memory for tpu_custom_call.1']
    #allocation6 [shape = 'u8[32768]{0}', space=vmem, size = 0x8000, scoped, tag = 'input window, operand 1, single buffered']
    #allocation7 [shape = 's32[1]{0}', space=sflag, size = 0x4, scoped, tag = 'scoped memory for tpu_custom_call.1']
    #allocation8 [shape = 'u8[32768]{0}', space=vmem, size = 0x8000, scoped, tag = 'input window, operand 2, single buffered']
    #allocation9 [shape = 'u8[32768]{0}', space=vmem, size = 0x8000, scoped, tag = 'output window, operand 0, single buffered']
    %8 = vsyncpa [#allocation4], 0
    %9 = vsyncpa [#allocation7], 0
    %10 = vsyncpa [#allocation5], 0
    // Predicated region
    $region2: #{tpu_custom_call.1} parent=1 // pred_check
      _
    $region3: #{tpu_custom_call.1} parent=1 // pred_check_branch
      %12 = sbr.rel (0) target = $region5
    $region4: #{tpu_custom_call.1} parent=1 // pred_region
      %14 = vsyncadd [#allocation4], 0
      %s15 = sshll.u32 %s0, 4
      %s16 = int_to_ptr.hbm [resolvable:$true] %s15
      %s17 = sshll.u32 [#allocation3], 4
      %s18 = int_to_ptr.vmem [resolvable:$true] %s17
      %23 = dma.hbm_to_vmem [thread:$0]  %s16, 1024, %s18, [#allocation4], 64, 64, 4
    $region5: #{tpu_custom_call.1} parent=1 // pred_fallthru
      _
    // Predicated region
    $region6: #{tpu_custom_call.1} parent=1 // pred_check
      _
    $region7: #{tpu_custom_call.1} parent=1 // pred_check_branch
      %25 = sbr.rel (0) target = $region9
    $region8: #{tpu_custom_call.1} parent=1 // pred_region
      %27 = vsyncadd [#allocation7], 0
      %s28 = sshll.u32 %s1, 4
      %s29 = int_to_ptr.hbm [resolvable:$true] %s28
      %s30 = sshll.u32 [#allocation6], 4
      %s31 = int_to_ptr.vmem [resolvable:$true] %s30
      %36 = dma.hbm_to_vmem [thread:$0]  %s29, 1024, %s31, [#allocation7], 64, 64, 4
    $region9: #{tpu_custom_call.1} parent=1 // pred_fallthru
      _
    // Predicated region
    $region10: #{tpu_custom_call.1} parent=1 // pred_check
      _
    $region11: #{tpu_custom_call.1} parent=1 // pred_check_branch
      %38 = sbr.rel (0) target = $region13
    $region12: #{tpu_custom_call.1} parent=1 // pred_region
      %40 = vsyncadd [#allocation7], 0
      %s41 = sshll.u32 %s2, 4
      %s42 = int_to_ptr.hbm [resolvable:$true] %s41
      %s43 = sshll.u32 [#allocation8], 4
      %s44 = int_to_ptr.vmem [resolvable:$true] %s43
      %49 = dma.hbm_to_vmem [thread:$0]  %s42, 1024, %s44, [#allocation7], 64, 64, 4
    $region13: #{tpu_custom_call.1} parent=1 // pred_fallthru
      _
    // Predicated region
    $region14: #{tpu_custom_call.1} parent=1 // pred_check
      _
    $region15: #{tpu_custom_call.1} parent=1 // pred_check_branch
      %51 = sbr.rel (0) target = $region17
    $region16: #{tpu_custom_call.1} parent=1 // pred_region
      %53 = dma.done [#allocation4], 1024
    $region17: #{tpu_custom_call.1} parent=1 // pred_fallthru
      _
    // Predicated region
    $region18: #{tpu_custom_call.1} parent=1 // pred_check
      _
    $region19: #{tpu_custom_call.1} parent=1 // pred_check_branch
      %55 = sbr.rel (0) target = $region21
    $region20: #{tpu_custom_call.1} parent=1 // pred_region
      %57 = dma.done [#allocation7], 1024
    $region21: #{tpu_custom_call.1} parent=1 // pred_fallthru
      _
    // Predicated region
    $region22: #{tpu_custom_call.1} parent=1 // pred_check
      _
    $region23: #{tpu_custom_call.1} parent=1 // pred_check_branch
      %59 = sbr.rel (0) target = $region25
    $region24: #{tpu_custom_call.1} parent=1 // pred_region
      %61 = dma.done [#allocation7], 1024
    $region25: #{tpu_custom_call.1} parent=1 // pred_fallthru
      _
    %p62 = scmp.eq.s32.totalorder 0, 0
    // Predicated region
    $region26: #{tpu_custom_call.1} parent=1 // pred_check
      %p63 = pneg %p62
    $region27: #{tpu_custom_call.1} parent=1 // pred_check_branch
      %65 = sbr.rel (%p63) target = $region29
    $region28: #{tpu_custom_call.1} parent=1 // pred_region
      %66 = vst [vmem:[#allocation2] sm:$0xff] 0.0
      %67 = vst [vmem:[#allocation2 + $0x8] sm:$0xff] 0.0
      %68 = vst [vmem:[#allocation2 + $0x10] sm:$0xff] 0.0
      %69 = vst [vmem:[#allocation2 + $0x18] sm:$0xff] 0.0
      %70 = vst [vmem:[#allocation2 + $0x20] sm:$0xff] 0.0
      %71 = vst [vmem:[#allocation2 + $0x28] sm:$0xff] 0.0
      %72 = vst [vmem:[#allocation2 + $0x30] sm:$0xff] 0.0
      %73 = vst [vmem:[#allocation2 + $0x38] sm:$0xff] 0.0
      %74 = vst [vmem:[#allocation2 + $0x40] sm:$0xff] 0.0
      %75 = vst [vmem:[#allocation2 + $0x48] sm:$0xff] 0.0
      %76 = vst [vmem:[#allocation2 + $0x50] sm:$0xff] 0.0
      %77 = vst [vmem:[#allocation2 + $0x58] sm:$0xff] 0.0
      %78 = vst [vmem:[#allocation2 + $0x60] sm:$0xff] 0.0
      %79 = vst [vmem:[#allocation2 + $0x68] sm:$0xff] 0.0
      %80 = vst [vmem:[#allocation2 + $0x70] sm:$0xff] 0.0
      %81 = vst [vmem:[#allocation2 + $0x78] sm:$0xff] 0.0
    $region29: #{tpu_custom_call.1} parent=1 // pred_fallthru
      _
    %v82 = vld [vmem:[#allocation2] sm:$0xff]
    %v83 = vld [vmem:[#allocation2 + $0x8] sm:$0xff]
    %v84 = vld [vmem:[#allocation2 + $0x10] sm:$0xff]
    %v85 = vld [vmem:[#allocation2 + $0x18] sm:$0xff]
    %v86 = vld [vmem:[#allocation2 + $0x20] sm:$0xff]
    %v87 = vld [vmem:[#allocation2 + $0x28] sm:$0xff]
    %v88 = vld [vmem:[#allocation2 + $0x30] sm:$0xff]
    %v89 = vld [vmem:[#allocation2 + $0x38] sm:$0xff]
    %v90 = vld [vmem:[#allocation2 + $0x40] sm:$0xff]
    %v91 = vld [vmem:[#allocation2 + $0x48] sm:$0xff]
    %v92 = vld [vmem:[#allocation2 + $0x50] sm:$0xff]
    %v93 = vld [vmem:[#allocation2 + $0x58] sm:$0xff]
    %v94 = vld [vmem:[#allocation2 + $0x60] sm:$0xff]
    %v95 = vld [vmem:[#allocation2 + $0x68] sm:$0xff]
    %v96 = vld [vmem:[#allocation2 + $0x70] sm:$0xff]
    %v97 = vld [vmem:[#allocation2 + $0x78] sm:$0xff]
    %v98 = vld [vmem:[#allocation3] sm:$0xf]
    %v99 = vld [vmem:[#allocation3 + $0x4] sm:$0xf]
    %v100 = vld [vmem:[#allocation3 + $0x8] sm:$0xf]
    %v101 = vld [vmem:[#allocation3 + $0xc] sm:$0xf]
    %v102 = vld [vmem:[#allocation3 + $0x10] sm:$0xf]
    %v103 = vld [vmem:[#allocation3 + $0x14] sm:$0xf]
    %v104 = vld [vmem:[#allocation3 + $0x18] sm:$0xf]
    %v105 = vld [vmem:[#allocation3 + $0x1c] sm:$0xf]
    %v106 = vld [vmem:[#allocation3 + $0x20] sm:$0xf]
    %v107 = vld [vmem:[#allocation3 + $0x24] sm:$0xf]
    %v108 = vld [vmem:[#allocation3 + $0x28] sm:$0xf]
    %v109 = vld [vmem:[#allocation3 + $0x2c] sm:$0xf]
    %v110 = vld [vmem:[#allocation3 + $0x30] sm:$0xf]
    %v111 = vld [vmem:[#allocation3 + $0x34] sm:$0xf]
    %v112 = vld [vmem:[#allocation3 + $0x38] sm:$0xf]
    %v113 = vld [vmem:[#allocation3 + $0x3c] sm:$0xf]
    %v114 = vld [vmem:[#allocation6] sm:$0xf]
    %v115 = vld [vmem:[#allocation6 + $0x4] sm:$0xf]
    %v116 = vld [vmem:[#allocation6 + $0x8] sm:$0xf]
    %v117 = vld [vmem:[#allocation6 + $0xc] sm:$0xf]
    %v118 = vld [vmem:[#allocation6 + $0x10] sm:$0xf]
    %v119 = vld [vmem:[#allocation6 + $0x14] sm:$0xf]
    %v120 = vld [vmem:[#allocation6 + $0x18] sm:$0xf]
    %v121 = vld [vmem:[#allocation6 + $0x1c] sm:$0xf]
    %v122 = vld [vmem:[#allocation6 + $0x20] sm:$0xf]
    %v123 = vld [vmem:[#allocation6 + $0x24] sm:$0xf]
    %v124 = vld [vmem:[#allocation6 + $0x28] sm:$0xf]
    %v125 = vld [vmem:[#allocation6 + $0x2c] sm:$0xf]
    %v126 = vld [vmem:[#allocation6 + $0x30] sm:$0xf]
    %v127 = vld [vmem:[#allocation6 + $0x34] sm:$0xf]
    %v128 = vld [vmem:[#allocation6 + $0x38] sm:$0xf]
    %v129 = vld [vmem:[#allocation6 + $0x3c] sm:$0xf]
    %v146 = vunpack.c.l.b16 %v98
    %v147 = vunpack.c.l.b16 %v99
    %v148 = vunpack.c.l.b16 %v100
    %v149 = vunpack.c.l.b16 %v101
    %v150 = vunpack.c.l.b16 %v102
    %v151 = vunpack.c.l.b16 %v103
    %v152 = vunpack.c.l.b16 %v104
    %v153 = vunpack.c.l.b16 %v105
    %v154 = vunpack.c.l.b16 %v106
    %v155 = vunpack.c.l.b16 %v107
    %v156 = vunpack.c.l.b16 %v108
    %v157 = vunpack.c.l.b16 %v109
    %v158 = vunpack.c.l.b16 %v110
    %v159 = vunpack.c.l.b16 %v111
    %v160 = vunpack.c.l.b16 %v112
    %v161 = vunpack.c.l.b16 %v113
    %v162 = vpack.c.b16 %v147, %v146
    %v163 = vpack.c.b16 %v149, %v148
    %v164 = vpack.c.b16 %v151, %v150
    %v165 = vpack.c.b16 %v153, %v152
    %v166 = vpack.c.b16 %v155, %v154
    %v167 = vpack.c.b16 %v157, %v156
    %v168 = vpack.c.b16 %v159, %v158
    %v169 = vpack.c.b16 %v161, %v160
    %v194 = vunpack.c.l.b16 %v114
    %v195 = vunpack.c.l.b16 %v115
    %v196 = vunpack.c.l.b16 %v116
    %v197 = vunpack.c.l.b16 %v117
    %v198 = vunpack.c.l.b16 %v118
    %v199 = vunpack.c.l.b16 %v119
    %v200 = vunpack.c.l.b16 %v120
    %v201 = vunpack.c.l.b16 %v121
    %v202 = vunpack.c.l.b16 %v122
    %v203 = vunpack.c.l.b16 %v123
    %v204 = vunpack.c.l.b16 %v124
    %v205 = vunpack.c.l.b16 %v125
    %v206 = vunpack.c.l.b16 %v126
    %v207 = vunpack.c.l.b16 %v127
    %v208 = vunpack.c.l.b16 %v128
    %v209 = vunpack.c.l.b16 %v129
    %v210 = vpack.c.b16 %v195, %v194
    %v211 = vpack.c.b16 %v197, %v196
    %v212 = vpack.c.b16 %v199, %v198
    %v213 = vpack.c.b16 %v201, %v200
    %v214 = vpack.c.b16 %v203, %v202
    %v215 = vpack.c.b16 %v205, %v204
    %v216 = vpack.c.b16 %v207, %v206
    %v217 = vpack.c.b16 %v209, %v208
    %226 = vmatpush.bf16.msra.mxu0 %v217
    %227 = vmatpush.bf16.msra.mxu0 %v216
    %228 = vmatpush.bf16.msra.mxu0 %v215
    %229 = vmatpush.bf16.msra.mxu0 %v214
    %230 = vmatpush.bf16.msra.mxu0 %v213
    %231 = vmatpush.bf16.msra.mxu0 %v212
    %232 = vmatpush.bf16.msra.mxu0 %v211
    %233 = vmatpush.bf16.msra.mxu0 %v210
    %234 = vmatmul.bf16.gmra.mxu0 %v162
    %v235 = vpop.f32.mrf.mxu0
    %v236 = vadd.f32 0.0, %v235
    %v237 = vpop.f32.mrf.mxu0
    %v238 = vadd.f32 0.0, %v237
    %239 = vmatmul.bf16.gmra.mxu0 %v163
    %v240 = vpop.f32.mrf.mxu0
    %v241 = vadd.f32 0.0, %v240
    %v242 = vpop.f32.mrf.mxu0
    %v243 = vadd.f32 0.0, %v242
    %244 = vmatmul.bf16.gmra.mxu0 %v164
    %v245 = vpop.f32.mrf.mxu0
    %v246 = vadd.f32 0.0, %v245
    %v247 = vpop.f32.mrf.mxu0
    %v248 = vadd.f32 0.0, %v247
    %249 = vmatmul.bf16.gmra.mxu0 %v165
    %v250 = vpop.f32.mrf.mxu0
    %v251 = vadd.f32 0.0, %v250
    %v252 = vpop.f32.mrf.mxu0
    %v253 = vadd.f32 0.0, %v252
    %254 = vmatmul.bf16.gmra.mxu0 %v166
    %v255 = vpop.f32.mrf.mxu0
    %v256 = vadd.f32 0.0, %v255
    %v257 = vpop.f32.mrf.mxu0
    %v258 = vadd.f32 0.0, %v257
    %259 = vmatmul.bf16.gmra.mxu0 %v167
    %v260 = vpop.f32.mrf.mxu0
    %v261 = vadd.f32 0.0, %v260
    %v262 = vpop.f32.mrf.mxu0
    %v263 = vadd.f32 0.0, %v262
    %264 = vmatmul.bf16.gmra.mxu0 %v168
    %v265 = vpop.f32.mrf.mxu0
    %v266 = vadd.f32 0.0, %v265
    %v267 = vpop.f32.mrf.mxu0
    %v268 = vadd.f32 0.0, %v267
    %269 = vmatmul.bf16.gmra.mxu0 %v169
    %v270 = vpop.f32.mrf.mxu0
    %v271 = vadd.f32 0.0, %v270
    %v272 = vpop.f32.mrf.mxu0
    %v273 = vadd.f32 0.0, %v272
    %274 = vdwg.mxu0
    %v275 = vadd.f32 %v82, %v236
    %v276 = vadd.f32 %v83, %v238
    %v277 = vadd.f32 %v84, %v241
    %v278 = vadd.f32 %v85, %v243
    %v279 = vadd.f32 %v86, %v246
    %v280 = vadd.f32 %v87, %v248
    %v281 = vadd.f32 %v88, %v251
    %v282 = vadd.f32 %v89, %v253
    %v283 = vadd.f32 %v90, %v256
    %v284 = vadd.f32 %v91, %v258
    %v285 = vadd.f32 %v92, %v261
    %v286 = vadd.f32 %v93, %v263
    %v287 = vadd.f32 %v94, %v266
    %v288 = vadd.f32 %v95, %v268
    %v289 = vadd.f32 %v96, %v271
    %v290 = vadd.f32 %v97, %v273
    %291 = vst [vmem:[#allocation2] sm:$0xff] %v275
    %292 = vst [vmem:[#allocation2 + $0x8] sm:$0xff] %v276
    %293 = vst [vmem:[#allocation2 + $0x10] sm:$0xff] %v277
    %294 = vst [vmem:[#allocation2 + $0x18] sm:$0xff] %v278
    %295 = vst [vmem:[#allocation2 + $0x20] sm:$0xff] %v279
    %296 = vst [vmem:[#allocation2 + $0x28] sm:$0xff] %v280
    %297 = vst [vmem:[#allocation2 + $0x30] sm:$0xff] %v281
    %298 = vst [vmem:[#allocation2 + $0x38] sm:$0xff] %v282
    %299 = vst [vmem:[#allocation2 + $0x40] sm:$0xff] %v283
    %300 = vst [vmem:[#allocation2 + $0x48] sm:$0xff] %v284
    %301 = vst [vmem:[#allocation2 + $0x50] sm:$0xff] %v285
    %302 = vst [vmem:[#allocation2 + $0x58] sm:$0xff] %v286
    %303 = vst [vmem:[#allocation2 + $0x60] sm:$0xff] %v287
    %304 = vst [vmem:[#allocation2 + $0x68] sm:$0xff] %v288
    %305 = vst [vmem:[#allocation2 + $0x70] sm:$0xff] %v289
    %306 = vst [vmem:[#allocation2 + $0x78] sm:$0xff] %v290
    // Predicated region
    $region30: #{tpu_custom_call.1} parent=1 // pred_check
      %p307 = pneg %p62
    $region31: #{tpu_custom_call.1} parent=1 // pred_check_branch
      %309 = sbr.rel (%p307) target = $region33
    $region32: #{tpu_custom_call.1} parent=1 // pred_region
      %v310 = vld [vmem:[#allocation2] sm:$0xff]
      %v311 = vld [vmem:[#allocation2 + $0x8] sm:$0xff]
      %v312 = vld [vmem:[#allocation2 + $0x10] sm:$0xff]
      %v313 = vld [vmem:[#allocation2 + $0x18] sm:$0xff]
      %v314 = vld [vmem:[#allocation2 + $0x20] sm:$0xff]
      %v315 = vld [vmem:[#allocation2 + $0x28] sm:$0xff]
      %v316 = vld [vmem:[#allocation2 + $0x30] sm:$0xff]
      %v317 = vld [vmem:[#allocation2 + $0x38] sm:$0xff]
      %v318 = vld [vmem:[#allocation2 + $0x40] sm:$0xff]
      %v319 = vld [vmem:[#allocation2 + $0x48] sm:$0xff]
      %v320 = vld [vmem:[#allocation2 + $0x50] sm:$0xff]
      %v321 = vld [vmem:[#allocation2 + $0x58] sm:$0xff]
      %v322 = vld [vmem:[#allocation2 + $0x60] sm:$0xff]
      %v323 = vld [vmem:[#allocation2 + $0x68] sm:$0xff]
      %v324 = vld [vmem:[#allocation2 + $0x70] sm:$0xff]
      %v325 = vld [vmem:[#allocation2 + $0x78] sm:$0xff]
      %v326 = vpack.c.bf16 %v311, %v310
      %v327 = vpack.c.bf16 %v313, %v312
      %v328 = vpack.c.bf16 %v315, %v314
      %v329 = vpack.c.bf16 %v317, %v316
      %v330 = vpack.c.bf16 %v319, %v318
      %v331 = vpack.c.bf16 %v321, %v320
      %v332 = vpack.c.bf16 %v323, %v322
      %v333 = vpack.c.bf16 %v325, %v324
      %v334 = vld [vmem:[#allocation8] sm:$0xf]
      %v335 = vld [vmem:[#allocation8 + $0x4] sm:$0xf]
      %v336 = vld [vmem:[#allocation8 + $0x8] sm:$0xf]
      %v337 = vld [vmem:[#allocation8 + $0xc] sm:$0xf]
      %v338 = vld [vmem:[#allocation8 + $0x10] sm:$0xf]
      %v339 = vld [vmem:[#allocation8 + $0x14] sm:$0xf]
      %v340 = vld [vmem:[#allocation8 + $0x18] sm:$0xf]
      %v341 = vld [vmem:[#allocation8 + $0x1c] sm:$0xf]
      %v342 = vld [vmem:[#allocation8 + $0x20] sm:$0xf]
      %v343 = vld [vmem:[#allocation8 + $0x24] sm:$0xf]
      %v344 = vld [vmem:[#allocation8 + $0x28] sm:$0xf]
      %v345 = vld [vmem:[#allocation8 + $0x2c] sm:$0xf]
      %v346 = vld [vmem:[#allocation8 + $0x30] sm:$0xf]
      %v347 = vld [vmem:[#allocation8 + $0x34] sm:$0xf]
      %v348 = vld [vmem:[#allocation8 + $0x38] sm:$0xf]
      %v349 = vld [vmem:[#allocation8 + $0x3c] sm:$0xf]
      %v366 = vunpack.c.l.b16 %v334
      %v367 = vunpack.c.l.b16 %v335
      %v368 = vunpack.c.l.b16 %v336
      %v369 = vunpack.c.l.b16 %v337
      %v370 = vunpack.c.l.b16 %v338
      %v371 = vunpack.c.l.b16 %v339
      %v372 = vunpack.c.l.b16 %v340
      %v373 = vunpack.c.l.b16 %v341
      %v374 = vunpack.c.l.b16 %v342
      %v375 = vunpack.c.l.b16 %v343
      %v376 = vunpack.c.l.b16 %v344
      %v377 = vunpack.c.l.b16 %v345
      %v378 = vunpack.c.l.b16 %v346
      %v379 = vunpack.c.l.b16 %v347
      %v380 = vunpack.c.l.b16 %v348
      %v381 = vunpack.c.l.b16 %v349
      %v382 = vpack.c.b16 %v367, %v366
      %v383 = vpack.c.b16 %v369, %v368
      %v384 = vpack.c.b16 %v371, %v370
      %v385 = vpack.c.b16 %v373, %v372
      %v386 = vpack.c.b16 %v375, %v374
      %v387 = vpack.c.b16 %v377, %v376
      %v388 = vpack.c.b16 %v379, %v378
      %v389 = vpack.c.b16 %v381, %v380
      %398 = vmatpush.bf16.msra.mxu0 %v389
      %399 = vmatpush.bf16.msra.mxu0 %v388
      %400 = vmatpush.bf16.msra.mxu0 %v387
      %401 = vmatpush.bf16.msra.mxu0 %v386
      %402 = vmatpush.bf16.msra.mxu0 %v385
      %403 = vmatpush.bf16.msra.mxu0 %v384
      %404 = vmatpush.bf16.msra.mxu0 %v383
      %405 = vmatpush.bf16.msra.mxu0 %v382
      %406 = vmatmul.bf16.gmra.mxu0 %v326
      %v407 = vpop.f32.mrf.mxu0
      %v408 = vadd.f32 0.0, %v407
      %v409 = vpop.f32.mrf.mxu0
      %v410 = vadd.f32 0.0, %v409
      %411 = vmatmul.bf16.gmra.mxu0 %v327
      %v412 = vpop.f32.mrf.mxu0
      %v413 = vadd.f32 0.0, %v412
      %v414 = vpop.f32.mrf.mxu0
      %v415 = vadd.f32 0.0, %v414
      %416 = vmatmul.bf16.gmra.mxu0 %v328
      %v417 = vpop.f32.mrf.mxu0
      %v418 = vadd.f32 0.0, %v417
      %v419 = vpop.f32.mrf.mxu0
      %v420 = vadd.f32 0.0, %v419
      %421 = vmatmul.bf16.gmra.mxu0 %v329
      %v422 = vpop.f32.mrf.mxu0
      %v423 = vadd.f32 0.0, %v422
      %v424 = vpop.f32.mrf.mxu0
      %v425 = vadd.f32 0.0, %v424
      %426 = vmatmul.bf16.gmra.mxu0 %v330
      %v427 = vpop.f32.mrf.mxu0
      %v428 = vadd.f32 0.0, %v427
      %v429 = vpop.f32.mrf.mxu0
      %v430 = vadd.f32 0.0, %v429
      %431 = vmatmul.bf16.gmra.mxu0 %v331
      %v432 = vpop.f32.mrf.mxu0
      %v433 = vadd.f32 0.0, %v432
      %v434 = vpop.f32.mrf.mxu0
      %v435 = vadd.f32 0.0, %v434
      %436 = vmatmul.bf16.gmra.mxu0 %v332
      %v437 = vpop.f32.mrf.mxu0
      %v438 = vadd.f32 0.0, %v437
      %v439 = vpop.f32.mrf.mxu0
      %v440 = vadd.f32 0.0, %v439
      %441 = vmatmul.bf16.gmra.mxu0 %v333
      %v442 = vpop.f32.mrf.mxu0
      %v443 = vadd.f32 0.0, %v442
      %v444 = vpop.f32.mrf.mxu0
      %v445 = vadd.f32 0.0, %v444
      %446 = vdwg.mxu0
      %v447 = vmax.f32 %v408, 0.0
      %v448 = vmax.f32 %v410, 0.0
      %v449 = vmax.f32 %v413, 0.0
      %v450 = vmax.f32 %v415, 0.0
      %v451 = vmax.f32 %v418, 0.0
      %v452 = vmax.f32 %v420, 0.0
      %v453 = vmax.f32 %v423, 0.0
      %v454 = vmax.f32 %v425, 0.0
      %v455 = vmax.f32 %v428, 0.0
      %v456 = vmax.f32 %v430, 0.0
      %v457 = vmax.f32 %v433, 0.0
      %v458 = vmax.f32 %v435, 0.0
      %v459 = vmax.f32 %v438, 0.0
      %v460 = vmax.f32 %v440, 0.0
      %v461 = vmax.f32 %v443, 0.0
      %v462 = vmax.f32 %v445, 0.0
      %v463 = vpack.c.bf16 %v447, %v447
      %v464 = vpack.c.bf16 %v448, %v448
      %v465 = vpack.c.bf16 %v449, %v449
      %v466 = vpack.c.bf16 %v450, %v450
      %v467 = vpack.c.bf16 %v451, %v451
      %v468 = vpack.c.bf16 %v452, %v452
      %v469 = vpack.c.bf16 %v453, %v453
      %v470 = vpack.c.bf16 %v454, %v454
      %v471 = vpack.c.bf16 %v455, %v455
      %v472 = vpack.c.bf16 %v456, %v456
      %v473 = vpack.c.bf16 %v457, %v457
      %v474 = vpack.c.bf16 %v458, %v458
      %v475 = vpack.c.bf16 %v459, %v459
      %v476 = vpack.c.bf16 %v460, %v460
      %v477 = vpack.c.bf16 %v461, %v461
      %v478 = vpack.c.bf16 %v462, %v462
      %479 = vst [vmem:[#allocation9] sm:$0xf] %v463
      %480 = vst [vmem:[#allocation9 + $0x4] sm:$0xf] %v464
      %481 = vst [vmem:[#allocation9 + $0x8] sm:$0xf] %v465
      %482 = vst [vmem:[#allocation9 + $0xc] sm:$0xf] %v466
      %483 = vst [vmem:[#allocation9 + $0x10] sm:$0xf] %v467
      %484 = vst [vmem:[#allocation9 + $0x14] sm:$0xf] %v468
      %485 = vst [vmem:[#allocation9 + $0x18] sm:$0xf] %v469
      %486 = vst [vmem:[#allocation9 + $0x1c] sm:$0xf] %v470
      %487 = vst [vmem:[#allocation9 + $0x20] sm:$0xf] %v471
      %488 = vst [vmem:[#allocation9 + $0x24] sm:$0xf] %v472
      %489 = vst [vmem:[#allocation9 + $0x28] sm:$0xf] %v473
      %490 = vst [vmem:[#allocation9 + $0x2c] sm:$0xf] %v474
      %491 = vst [vmem:[#allocation9 + $0x30] sm:$0xf] %v475
      %492 = vst [vmem:[#allocation9 + $0x34] sm:$0xf] %v476
      %493 = vst [vmem:[#allocation9 + $0x38] sm:$0xf] %v477
      %494 = vst [vmem:[#allocation9 + $0x3c] sm:$0xf] %v478
    $region33: #{tpu_custom_call.1} parent=1 // pred_fallthru
      _
    // Predicated region
    $region34: #{tpu_custom_call.1} parent=1 // pred_check
      _
    $region35: #{tpu_custom_call.1} parent=1 // pred_check_branch
      %496 = sbr.rel (0) target = $region37
    $region36: #{tpu_custom_call.1} parent=1 // pred_region
      %498 = vsyncadd [#allocation5], 0
      %s499 = sshll.u32 [#allocation9], 4
      %s500 = int_to_ptr.vmem [resolvable:$true] %s499
      %s501 = sshll.u32 %s3, 4
      %s502 = int_to_ptr.hbm [resolvable:$true] %s501
      %507 = dma.vmem_to_hbm [thread:$0]  %s500, 1024, %s502, [#allocation5], 64, 64, 4
    $region37: #{tpu_custom_call.1} parent=1 // pred_fallthru
      _
    // Predicated region
    $region38: #{tpu_custom_call.1} parent=1 // pred_check
      _
    $region39: #{tpu_custom_call.1} parent=1 // pred_check_branch
      %509 = sbr.rel (0) target = $region41
    $region40: #{tpu_custom_call.1} parent=1 // pred_region
      %511 = dma.done [#allocation5], 1024
    $region41: #{tpu_custom_call.1} parent=1 // pred_fallthru
      _
    %512 = vsyncpa [#allocation4], 1
    %513 = vsyncpa [#allocation7], 1
    %514 = vsyncpa [#allocation5], 1

</llo_original>
